<compile_context>
chip_gen: v7x
topology: tpu7x:2x2x1
jax: 0.10.0
libtpu: 0.0.40
codegen_flags: <defaults>
</compile_context>

<pallas_src>
import functools

import jax
import jax.numpy as jnp
from jax.experimental import pallas as pl
from jax.experimental.pallas import tpu as pltpu

HID_SIZE = 32                 # stand-in for agent_config_file.HID_SIZE
LANES = 128                   # fused head output padded to one full vreg lane width
MATMUL_DTYPE = jnp.bfloat16   # matmul-input dtype (accumulate/elementwise stay f32)
OUT_DTYPE = jnp.bfloat16      # head-slab writeback dtype (halves HBM write bytes)


def _round_up(x, m):
    return ((x + m - 1) // m) * m


def _softplus(z):
    # numerically-stable softplus, matches torch.nn.Softplus (beta=1)
    return jnp.maximum(z, 0.0) + jnp.log1p(jnp.exp(-jnp.abs(z)))


def _a2c_kernel(x_ref, w1_ref, b1_ref, wh_ref, bh_ref, mask_ref, out_ref):
    # base: Linear + ReLU (bf16 MXU inputs, f32 accumulate, f32 elementwise)
    h = jnp.dot(x_ref[...], w1_ref[...], preferred_element_type=jnp.float32)
    h = jnp.maximum(h + b1_ref[...], 0.0)

    # fused heads: one lane-dense (tm, 128) matmul covers [mu | var | value | 0-pad]
    y = jnp.dot(h.astype(wh_ref.dtype), wh_ref[...],
                preferred_element_type=jnp.float32) + bh_ref[...]

    # per-lane blend with a precomputed (1, 128) mask:
    #   mask == 1 -> softplus (mu / var lanes), mask == 0 -> linear (value / pad)
    sp = _softplus(y)
    out_ref[...] = (y + mask_ref[...] * (sp - y)).astype(out_ref.dtype)


def pack_params(params):
    """Fuse the three head weights/biases into one lane-dense (hid, 128) pair."""
    hid = params["w1"].shape[1]
    act = params["w_mu"].shape[1]
    assert 2 * act + 1 <= LANES

    w_heads = jnp.zeros((hid, LANES), jnp.float32)
    w_heads = w_heads.at[:, :act].set(params["w_mu"])
    w_heads = w_heads.at[:, act:2 * act].set(params["w_var"])
    w_heads = w_heads.at[:, 2 * act:2 * act + 1].set(params["w_v"])

    b_heads = jnp.zeros((1, LANES), jnp.float32)
    b_heads = b_heads.at[:, :act].set(params["b_mu"][0])
    b_heads = b_heads.at[:, act:2 * act].set(params["b_var"][0])
    b_heads = b_heads.at[:, 2 * act:2 * act + 1].set(params["b_v"][0])

    # hoisted softplus lane mask: 1.0 on the mu/var lanes, 0.0 elsewhere
    head_mask = jnp.zeros((1, LANES), jnp.float32).at[:, :2 * act].set(1.0)

    return {
        "w1": params["w1"].astype(MATMUL_DTYPE),
        "b1": params["b1"].astype(jnp.float32),
        "w_heads": w_heads.astype(MATMUL_DTYPE),
        "b_heads": b_heads,
        "head_mask": head_mask,
    }


@functools.partial(jax.jit, static_argnames=("act_size", "tm"))
def model_a2c_forward(x, packed, act_size, tm=2048):
    """x: (B, obs) float32. packed: output of pack_params. Returns (mu, var, value)."""
    B, obs = x.shape
    n_heads = 2 * act_size + 1

    # --- batch tile choice ---------------------------------------------------
    # Big tiles amortise the ~0.35 us/step pipeline overhead, but keep >= 4
    # grid steps when the batch allows so the "parallel" axis can feed both
    # v7x TensorCores.  Tiny batches collapse to a single full-array block
    # (block shape == array shape is always legal).  No wrapper-side padding:
    # a ragged last block is masked by Pallas (grid uses pl.cdiv).
    if B < 32:
        tm_eff = B
    else:
        tm_eff = min(_round_up(tm, 8), _round_up(pl.cdiv(B, 4), 8))
    grid = (pl.cdiv(B, tm_eff),)

    def resident(shape):
        # constant index_map: DMA'd once, stays resident across all batch tiles
        return pl.BlockSpec(shape, lambda i: (0,) * len(shape))

    out = pl.pallas_call(
        _a2c_kernel,
        out_shape=jax.ShapeDtypeStruct((B, LANES), OUT_DTYPE),
        grid=grid,
        in_specs=[
            # batch-tiled activations.  If xprof shows the x DMA still exposed
            # at large tm, deepen only this spec: pipeline_mode=pl.Buffered(3).
            pl.BlockSpec((tm_eff, obs), lambda i: (i, 0)),
            resident(packed["w1"].shape),
            resident(packed["b1"].shape),
            resident(packed["w_heads"].shape),
            resident(packed["b_heads"].shape),
            resident(packed["head_mask"].shape),
        ],
        out_specs=pl.BlockSpec((tm_eff, LANES), lambda i: (i, 0)),
        compiler_params=pltpu.CompilerParams(
            dimension_semantics=("parallel",)),        # shard batch across TCs (v7x)
    )(x.astype(MATMUL_DTYPE), packed["w1"], packed["b1"],
      packed["w_heads"], packed["b_heads"], packed["head_mask"])

    # one contiguous narrow upcast of the useful lanes, then cheap sub-slices
    heads = out[:, :n_heads].astype(jnp.float32)
    mu = heads[:, :act_size]
    var = heads[:, act_size:2 * act_size]
    value = heads[:, 2 * act_size:]
    return mu, var, value


def init_params(key, obs_size, act_size, hid_size=HID_SIZE):
    """Deterministic synthetic init (PyTorch-style uniform fan-in bound), f32."""
    def linear(key, fan_in, fan_out):
        k_w, k_b = jax.random.split(key)
        bound = 1.0 / jnp.sqrt(fan_in)
        w = jax.random.uniform(k_w, (fan_in, fan_out), jnp.float32, -bound, bound)
        b = jax.random.uniform(k_b, (1, fan_out), jnp.float32, -bound, bound)
        return w, b

    k1, k2, k3, k4 = jax.random.split(key, 4)
    w1, b1 = linear(k1, obs_size, hid_size)
    w_mu, b_mu = linear(k2, hid_size, act_size)
    w_var, b_var = linear(k3, hid_size, act_size)
    w_v, b_v = linear(k4, hid_size, 1)
    return {"w1": w1, "b1": b1, "w_mu": w_mu, "b_mu": b_mu,
            "w_var": w_var, "b_var": b_var, "w_v": w_v, "b_v": b_v}


if __name__ == "__main__":
    key = jax.random.PRNGKey(0)
    k_params, k_x = jax.random.split(key)

    batch, obs_size, act_size = 512, 16, 4      # tile heuristic -> 4 steps of tm=128
    raw = init_params(k_params, obs_size, act_size, HID_SIZE)
    packed = pack_params(raw)
    x = jax.random.normal(k_x, (batch, obs_size), jnp.float32)

    mu, var, value = model_a2c_forward(x, packed, act_size)
    jax.block_until_ready((mu, var, value))

    # plain-JAX reference using the same precision pipeline as the kernel
    xc = x.astype(MATMUL_DTYPE)
    h = jnp.maximum(
        jnp.dot(xc, packed["w1"], preferred_element_type=jnp.float32) + packed["b1"],
        0.0)
    y = jnp.dot(h.astype(MATMUL_DTYPE), packed["w_heads"],
                preferred_element_type=jnp.float32) + packed["b_heads"]
    sp = jnp.maximum(y, 0.0) + jnp.log1p(jnp.exp(-jnp.abs(y)))
    slab = (y + packed["head_mask"] * (sp - y)).astype(OUT_DTYPE).astype(jnp.float32)
    mu_ref = slab[:, :act_size]
    var_ref = slab[:, act_size:2 * act_size]
    val_ref = slab[:, 2 * act_size:2 * act_size + 1]

    assert mu.shape == (batch, act_size) and var.shape == (batch, act_size)
    assert value.shape == (batch, 1)
    assert jnp.allclose(mu, mu_ref, atol=1e-2), float(jnp.abs(mu - mu_ref).max())
    assert jnp.allclose(var, var_ref, atol=1e-2), float(jnp.abs(var - var_ref).max())
    assert jnp.allclose(value, val_ref, atol=1e-2), float(jnp.abs(value - val_ref).max())
    # Softplus heads are non-negative, matching nn.Softplus semantics
    assert bool(jnp.all(mu >= 0.0)) and bool(jnp.all(var >= 0.0))

    print("KERNEL_OK")
</pallas_src>

<mosaic_0001>
module attributes {stable_mosaic.version = 11 : i64} {
  func.func @_a2c_kernel(%arg0: i32, %arg1: memref<128x16xbf16, #tpu.memory_space<vmem>>, %arg2: memref<16x32xbf16, #tpu.memory_space<vmem>>, %arg3: memref<1x32xf32, #tpu.memory_space<vmem>>, %arg4: memref<32x128xbf16, #tpu.memory_space<vmem>>, %arg5: memref<1x128xf32, #tpu.memory_space<vmem>>, %arg6: memref<1x128xf32, #tpu.memory_space<vmem>>, %arg7: memref<128x128xbf16, #tpu.memory_space<vmem>>) attributes {dimension_semantics = [#tpu.dimension_semantics<parallel>], iteration_bounds = array<i64: 4>, scalar_prefetch = 0 : i64, scratch_operands = 0 : i64, tpu.core_type = #tpu.core_type<tc>, window_params = [{transform_indices = @transform_0, window_bounds = array<i64: 128, 16>}, {pipeline_mode = #tpu.pipeline_mode<synchronous>, transform_indices = @transform_1, window_bounds = array<i64: 16, 32>}, {pipeline_mode = #tpu.pipeline_mode<synchronous>, transform_indices = @transform_2, window_bounds = array<i64: 1, 32>}, {pipeline_mode = #tpu.pipeline_mode<synchronous>, transform_indices = @transform_3, window_bounds = array<i64: 32, 128>}, {pipeline_mode = #tpu.pipeline_mode<synchronous>, transform_indices = @transform_4, window_bounds = array<i64: 1, 128>}, {pipeline_mode = #tpu.pipeline_mode<synchronous>, transform_indices = @transform_5, window_bounds = array<i64: 1, 128>}, {transform_indices = @transform_6, window_bounds = array<i64: 128, 128>}]} {
    %c0 = arith.constant 0 : index
    %c0_0 = arith.constant 0 : index
    %0 = vector.load %arg1[%c0, %c0_0] : memref<128x16xbf16, #tpu.memory_space<vmem>>, vector<128x16xbf16>
    %c0_1 = arith.constant 0 : index
    %c0_2 = arith.constant 0 : index
    %1 = vector.load %arg2[%c0_1, %c0_2] : memref<16x32xbf16, #tpu.memory_space<vmem>>, vector<16x32xbf16>
    %cst = arith.constant dense<0.000000e+00> : vector<128x32xf32>
    %2 = tpu.matmul %0, %1, %cst {dimension_numbers = #tpu.dot_dimension_numbers<[1], [0], [0], [1], [0, 0, 1, 1], [], []>} : vector<128x16xbf16>, vector<16x32xbf16>, vector<128x32xf32> -> vector<128x32xf32>
    %c0_3 = arith.constant 0 : index
    %c0_4 = arith.constant 0 : index
    %3 = vector.load %arg3[%c0_3, %c0_4] : memref<1x32xf32, #tpu.memory_space<vmem>>, vector<1x32xf32>
    %4 = vector.broadcast %3 : vector<1x32xf32> to vector<128x32xf32>
    %5 = arith.addf %2, %4 : vector<128x32xf32>
    %cst_5 = arith.constant 0.000000e+00 : f32
    %6 = vector.broadcast %cst_5 : f32 to vector<128x32xf32>
    %7 = arith.maximumf %5, %6 : vector<128x32xf32>
    %8 = arith.truncf %7 : vector<128x32xf32> to vector<128x32xbf16>
    %c0_6 = arith.constant 0 : index
    %c0_7 = arith.constant 0 : index
    %9 = vector.load %arg4[%c0_6, %c0_7] : memref<32x128xbf16, #tpu.memory_space<vmem>>, vector<32x128xbf16>
    %cst_8 = arith.constant dense<0.000000e+00> : vector<128x128xf32>
    %10 = tpu.matmul %8, %9, %cst_8 {dimension_numbers = #tpu.dot_dimension_numbers<[1], [0], [0], [1], [0, 0, 1, 1], [], []>} : vector<128x32xbf16>, vector<32x128xbf16>, vector<128x128xf32> -> vector<128x128xf32>
    %c0_9 = arith.constant 0 : index
    %c0_10 = arith.constant 0 : index
    %11 = vector.load %arg5[%c0_9, %c0_10] : memref<1x128xf32, #tpu.memory_space<vmem>>, vector<1x128xf32>
    %12 = vector.broadcast %11 : vector<1x128xf32> to vector<128x128xf32>
    %13 = arith.addf %10, %12 : vector<128x128xf32>
    %cst_11 = arith.constant 0.000000e+00 : f32
    %14 = vector.broadcast %cst_11 : f32 to vector<128x128xf32>
    %15 = arith.maximumf %13, %14 : vector<128x128xf32>
    %16 = math.absf %13 : vector<128x128xf32>
    %cst_12 = arith.constant 0.000000e+00 : f32
    %17 = vector.broadcast %cst_12 : f32 to vector<128x128xf32>
    %18 = arith.subf %17, %16 : vector<128x128xf32>
    %19 = math.exp %18 : vector<128x128xf32>
    %20 = math.log1p %19 : vector<128x128xf32>
    %21 = arith.addf %15, %20 : vector<128x128xf32>
    %c0_13 = arith.constant 0 : index
    %c0_14 = arith.constant 0 : index
    %22 = vector.load %arg6[%c0_13, %c0_14] : memref<1x128xf32, #tpu.memory_space<vmem>>, vector<1x128xf32>
    %23 = arith.subf %21, %13 : vector<128x128xf32>
    %24 = vector.broadcast %22 : vector<1x128xf32> to vector<128x128xf32>
    %25 = arith.mulf %24, %23 : vector<128x128xf32>
    %26 = arith.addf %13, %25 : vector<128x128xf32>
    %27 = arith.truncf %26 : vector<128x128xf32> to vector<128x128xbf16>
    %c0_15 = arith.constant 0 : index
    %c0_16 = arith.constant 0 : index
    %28 = vector.load %arg7[%c0_15, %c0_16] : memref<128x128xbf16, #tpu.memory_space<vmem>>, vector<128x128xbf16>
    tpu.vector_store %arg7[%c0_15, %c0_16], %27 {strides = array<i32>} : memref<128x128xbf16, #tpu.memory_space<vmem>>, vector<128x128xbf16>,
    return
  }
  func.func @transform_0(%arg0: i32) -> (i32, i32) {
    %c0_i32 = arith.constant 0 : i32
    %c0_i32_0 = arith.constant 0 : i32
    return %arg0, %c0_i32 : i32, i32
  }
  func.func @transform_1(%arg0: i32) -> (i32, i32) {
    %c0_i32 = arith.constant 0 : i32
    %c0_i32_0 = arith.constant 0 : i32
    %c0_i32_1 = arith.constant 0 : i32
    return %c0_i32, %c0_i32_0 : i32, i32
  }
  func.func @transform_2(%arg0: i32) -> (i32, i32) {
    %c0_i32 = arith.constant 0 : i32
    %c0_i32_0 = arith.constant 0 : i32
    %c0_i32_1 = arith.constant 0 : i32
    return %c0_i32, %c0_i32_0 : i32, i32
  }
  func.func @transform_3(%arg0: i32) -> (i32, i32) {
    %c0_i32 = arith.constant 0 : i32
    %c0_i32_0 = arith.constant 0 : i32
    %c0_i32_1 = arith.constant 0 : i32
    return %c0_i32, %c0_i32_0 : i32, i32
  }
  func.func @transform_4(%arg0: i32) -> (i32, i32) {
    %c0_i32 = arith.constant 0 : i32
    %c0_i32_0 = arith.constant 0 : i32
    %c0_i32_1 = arith.constant 0 : i32
    return %c0_i32, %c0_i32_0 : i32, i32
  }
  func.func @transform_5(%arg0: i32) -> (i32, i32) {
    %c0_i32 = arith.constant 0 : i32
    %c0_i32_0 = arith.constant 0 : i32
    %c0_i32_1 = arith.constant 0 : i32
    return %c0_i32, %c0_i32_0 : i32, i32
  }
  func.func @transform_6(%arg0: i32) -> (i32, i32) {
    %c0_i32 = arith.constant 0 : i32
    %c0_i32_0 = arith.constant 0 : i32
    return %arg0, %c0_i32 : i32, i32
  }
}

</mosaic_0001>

<llo_original>
// kernel: model_a2c_forward.1
$region0: #{model_a2c_forward.1}
  #allocation0 [shape = 'u32[]', space=smem, size = 0x4, offset = 0x4, fixed_abs, tag = 'smem constant byte address 0x4 - core index']
  #allocation1 [shape = 'u32[144,128]{1,0:T(1,128)}', space=vmem, size = 0x12000, scoped, tag = 'internal scratch']
  %s0 = inlined_call_operand.vmem [shape: bf16[512,16], index: 0, kind: input, shape index: {}]
  %s1 = inlined_call_operand.vmem [shape: bf16[16,32], index: 1, kind: input, shape index: {}]
  %s2 = inlined_call_operand.vmem [shape: f32[1,32], index: 2, kind: input, shape index: {}]
  %s3 = inlined_call_operand.vmem [shape: bf16[32,128], index: 3, kind: input, shape index: {}]
  %s4 = inlined_call_operand.vmem [shape: f32[1,128], index: 4, kind: input, shape index: {}]
  %s5 = inlined_call_operand.vmem [shape: f32[1,128], index: 5, kind: input, shape index: {}]
  %s6 = inlined_call_operand.vmem [shape: bf16[512,128], index: 6, kind: output, shape index: {}]
  %s7 = sld [smem:[#allocation0]]
  $region57: #{model_a2c_forward.1} parent=0
    _
  %s9 = ssub.s32 1, %s7
  %s10 = scalar_select 0, %s9, %s7
  loop: start=0, step=1, limit=6
  $region2: #{model_a2c_forward.1} parent=0 // loop_pre_header
    _
  $region3: #{model_a2c_forward.1} parent=0 // loop_header
    %s12 = sphi 0, %s16
    %p13 = scmp.ge.s32.totalorder %s12, 6
    %s22 = sphi 0, %s24
    %s25 = sphi 0, %s22
    %s26 = sphi 0, %s25
    %s42 = sphi 0, %s26
    %s46 = sphi 0, %s46
    %s48 = sphi 0, %s46
    %s49 = sphi 0, %s48
    %s63 = sphi 0, %s49
    %s67 = sphi 0, %s67
    %s69 = sphi 0, %s67
    %s70 = sphi 0, %s69
    %s84 = sphi 0, %s70
    %s88 = sphi 0, %s88
    %s90 = sphi 0, %s88
    %s91 = sphi 0, %s90
    %s105 = sphi 0, %s91
    %s109 = sphi 0, %s109
    %s111 = sphi 0, %s109
    %s112 = sphi 0, %s111
    %s126 = sphi 0, %s112
    %s130 = sphi 0, %s130
    %s132 = sphi 0, %s130
    %s133 = sphi 0, %s132
    %s147 = sphi 0, %s133
    %s153 = sphi 0, %s155
    %s156 = sphi 0, %s153
    %s157 = sphi 0, %s156
    %s173 = sphi 0, %s157
  $region4: #{model_a2c_forward.1} parent=0 // loop_header_branch
    %15 = sbr.rel (%p13) target = $region8
  $region5: #{model_a2c_forward.1} parent=0 // loop_body
    %s17 = ssub.s32 %s12, 1
    %s18 = ssub.s32 %s12, 2
    %s19 = sadd.s32 %s12, 1
    %s20 = ssub.s32 %s12, %s19
    %p21 = scmp.eq.s32.totalorder %s20, 0
    %s23 = sadd.s32 %s22, 1
    %s24 = scalar_select %p21, %s22, %s23
    %p27 = pneg %p21
    %p28 = scmp.eq.s32.totalorder %s12, 3
    %p29 = por %p27, %p28
    %p30 = scmp.ne.s32.totalorder %s22, %s25
    %p31 = scmp.eq.s32.totalorder %s12, 0
    %p32 = por %p30, %p31
    %p33 = scmp.ne.s32.totalorder %s22, %s25
    %p34 = scmp.eq.s32.totalorder %s17, 3
    %p35 = por %p33, %p34
    %p36 = scmp.ne.s32.totalorder %s25, %s26
    %p37 = scmp.eq.s32.totalorder %s17, 0
    %p38 = por %p36, %p37
    %p39 = scmp.ne.s32.totalorder %s25, %s26
    %p40 = scmp.eq.s32.totalorder %s18, 3
    %p41 = por %p39, %p40
    %p43 = scmp.ne.s32.totalorder %s26, %s42
    %p44 = scmp.eq.s32.totalorder %s18, 0
    %p45 = por %p43, %p44
    %s47 = sadd.s32 %s46, 1
    %p50 = scmp.eq.s32.totalorder %s12, 3
    %p51 = scmp.ne.s32.totalorder %s46, %s48
    %p52 = scmp.eq.s32.totalorder %s12, 0
    %p53 = por %p51, %p52
    %p54 = scmp.ne.s32.totalorder %s46, %s48
    %p55 = scmp.eq.s32.totalorder %s17, 3
    %p56 = por %p54, %p55
    %p57 = scmp.ne.s32.totalorder %s48, %s49
    %p58 = scmp.eq.s32.totalorder %s17, 0
    %p59 = por %p57, %p58
    %p60 = scmp.ne.s32.totalorder %s48, %s49
    %p61 = scmp.eq.s32.totalorder %s18, 3
    %p62 = por %p60, %p61
    %p64 = scmp.ne.s32.totalorder %s49, %s63
    %p65 = scmp.eq.s32.totalorder %s18, 0
    %p66 = por %p64, %p65
    %s68 = sadd.s32 %s67, 1
    %p71 = scmp.eq.s32.totalorder %s12, 3
    %p72 = scmp.ne.s32.totalorder %s67, %s69
    %p73 = scmp.eq.s32.totalorder %s12, 0
    %p74 = por %p72, %p73
    %p75 = scmp.ne.s32.totalorder %s67, %s69
    %p76 = scmp.eq.s32.totalorder %s17, 3
    %p77 = por %p75, %p76
    %p78 = scmp.ne.s32.totalorder %s69, %s70
    %p79 = scmp.eq.s32.totalorder %s17, 0
    %p80 = por %p78, %p79
    %p81 = scmp.ne.s32.totalorder %s69, %s70
    %p82 = scmp.eq.s32.totalorder %s18, 3
    %p83 = por %p81, %p82
    %p85 = scmp.ne.s32.totalorder %s70, %s84
    %p86 = scmp.eq.s32.totalorder %s18, 0
    %p87 = por %p85, %p86
    %s89 = sadd.s32 %s88, 1
    %p92 = scmp.eq.s32.totalorder %s12, 3
    %p93 = scmp.ne.s32.totalorder %s88, %s90
    %p94 = scmp.eq.s32.totalorder %s12, 0
    %p95 = por %p93, %p94
    %p96 = scmp.ne.s32.totalorder %s88, %s90
    %p97 = scmp.eq.s32.totalorder %s17, 3
    %p98 = por %p96, %p97
    %p99 = scmp.ne.s32.totalorder %s90, %s91
    %p100 = scmp.eq.s32.totalorder %s17, 0
    %p101 = por %p99, %p100
    %p102 = scmp.ne.s32.totalorder %s90, %s91
    %p103 = scmp.eq.s32.totalorder %s18, 3
    %p104 = por %p102, %p103
    %p106 = scmp.ne.s32.totalorder %s91, %s105
    %p107 = scmp.eq.s32.totalorder %s18, 0
    %p108 = por %p106, %p107
    %s110 = sadd.s32 %s109, 1
    %p113 = scmp.eq.s32.totalorder %s12, 3
    %p114 = scmp.ne.s32.totalorder %s109, %s111
    %p115 = scmp.eq.s32.totalorder %s12, 0
    %p116 = por %p114, %p115
    %p117 = scmp.ne.s32.totalorder %s109, %s111
    %p118 = scmp.eq.s32.totalorder %s17, 3
    %p119 = por %p117, %p118
    %p120 = scmp.ne.s32.totalorder %s111, %s112
    %p121 = scmp.eq.s32.totalorder %s17, 0
    %p122 = por %p120, %p121
    %p123 = scmp.ne.s32.totalorder %s111, %s112
    %p124 = scmp.eq.s32.totalorder %s18, 3
    %p125 = por %p123, %p124
    %p127 = scmp.ne.s32.totalorder %s112, %s126
    %p128 = scmp.eq.s32.totalorder %s18, 0
    %p129 = por %p127, %p128
    %s131 = sadd.s32 %s130, 1
    %p134 = scmp.eq.s32.totalorder %s12, 3
    %p135 = scmp.ne.s32.totalorder %s130, %s132
    %p136 = scmp.eq.s32.totalorder %s12, 0
    %p137 = por %p135, %p136
    %p138 = scmp.ne.s32.totalorder %s130, %s132
    %p139 = scmp.eq.s32.totalorder %s17, 3
    %p140 = por %p138, %p139
    %p141 = scmp.ne.s32.totalorder %s132, %s133
    %p142 = scmp.eq.s32.totalorder %s17, 0
    %p143 = por %p141, %p142
    %p144 = scmp.ne.s32.totalorder %s132, %s133
    %p145 = scmp.eq.s32.totalorder %s18, 3
    %p146 = por %p144, %p145
    %p148 = scmp.ne.s32.totalorder %s133, %s147
    %p149 = scmp.eq.s32.totalorder %s18, 0
    %p150 = por %p148, %p149
    %s151 = ssub.s32 %s12, %s19
    %p152 = scmp.eq.s32.totalorder %s151, 0
    %s154 = sadd.s32 %s153, 1
    %s155 = scalar_select %p152, %s153, %s154
    %p158 = pneg %p152
    %p159 = scmp.eq.s32.totalorder %s12, 3
    %p160 = por %p158, %p159
    %p161 = scmp.ne.s32.totalorder %s153, %s156
    %p162 = scmp.eq.s32.totalorder %s12, 0
    %p163 = por %p161, %p162
    %p164 = scmp.ne.s32.totalorder %s153, %s156
    %p165 = scmp.eq.s32.totalorder %s17, 3
    %p166 = por %p164, %p165
    %p167 = scmp.ne.s32.totalorder %s156, %s157
    %p168 = scmp.eq.s32.totalorder %s17, 0
    %p169 = por %p167, %p168
    %p170 = scmp.ne.s32.totalorder %s156, %s157
    %p171 = scmp.eq.s32.totalorder %s18, 3
    %p172 = por %p170, %p171
    %p174 = scmp.ne.s32.totalorder %s157, %s173
    %p175 = scmp.eq.s32.totalorder %s18, 0
    %p176 = por %p174, %p175
    %p177 = scmp.le.s32.totalorder 1, %s12
    %p178 = scmp.lt.s32.totalorder %s12, 5
    %p179 = pnand %p177, %p178
    %p180 = pneg %p179
    // Predicated region
    $region9: #{model_a2c_forward.1} parent=5 // pred_check
      _
    $region10: #{model_a2c_forward.1} parent=5 // pred_check_branch
      %182 = sbr.rel (%p179) target = $region12
    $region11: #{model_a2c_forward.1} parent=5 // pred_region
      %s183 = ssub.s32 %s12, 1
      // Predicated region
      $region13: #{model_a2c_forward.1} parent=11 // pred_check
        %p184 = pneg %p59
      $region14: #{model_a2c_forward.1} parent=11 // pred_check_branch
        %186 = sbr.rel (%p184) target = $region16
      $region15: #{model_a2c_forward.1} parent=11 // pred_region
        _
      $region16: #{model_a2c_forward.1} parent=11 // pred_fallthru
        _
      // Predicated region
      $region17: #{model_a2c_forward.1} parent=11 // pred_check
        %p187 = pneg %p80
      $region18: #{model_a2c_forward.1} parent=11 // pred_check_branch
        %189 = sbr.rel (%p187) target = $region20
      $region19: #{model_a2c_forward.1} parent=11 // pred_region
        _
      $region20: #{model_a2c_forward.1} parent=11 // pred_fallthru
        _
      // Predicated region
      $region21: #{model_a2c_forward.1} parent=11 // pred_check
        %p190 = pneg %p101
      $region22: #{model_a2c_forward.1} parent=11 // pred_check_branch
        %192 = sbr.rel (%p190) target = $region24
      $region23: #{model_a2c_forward.1} parent=11 // pred_region
        _
      $region24: #{model_a2c_forward.1} parent=11 // pred_fallthru
        _
      // Predicated region
      $region25: #{model_a2c_forward.1} parent=11 // pred_check
        %p193 = pneg %p122
      $region26: #{model_a2c_forward.1} parent=11 // pred_check_branch
        %195 = sbr.rel (%p193) target = $region28
      $region27: #{model_a2c_forward.1} parent=11 // pred_region
        _
      $region28: #{model_a2c_forward.1} parent=11 // pred_fallthru
        _
      // Predicated region
      $region29: #{model_a2c_forward.1} parent=11 // pred_check
        %p196 = pneg %p143
      $region30: #{model_a2c_forward.1} parent=11 // pred_check_branch
        %198 = sbr.rel (%p196) target = $region32
      $region31: #{model_a2c_forward.1} parent=11 // pred_region
        _
      $region32: #{model_a2c_forward.1} parent=11 // pred_fallthru
        _
    $region12: #{model_a2c_forward.1} parent=5 // pred_fallthru
      _
    %p199 = scmp.lt.s32.totalorder %s12, 4
    // Predicated region
    $region33: #{model_a2c_forward.1} parent=5 // pred_check
      %p200 = pneg %p199
    $region34: #{model_a2c_forward.1} parent=5 // pred_check_branch
      %202 = sbr.rel (%p200) target = $region36
    $region35: #{model_a2c_forward.1} parent=5 // pred_region
      // Predicated region
      $region37: #{model_a2c_forward.1} parent=35 // pred_check
        %p203 = pneg %p32
      $region38: #{model_a2c_forward.1} parent=35 // pred_check_branch
        %205 = sbr.rel (%p203) target = $region40
      $region39: #{model_a2c_forward.1} parent=35 // pred_region
        %s206 = smul.u32 16, %s12
        %p207 = scmp.lt.s32.totalorder %s206, 63
        %s208 = scalar_select %p207, %s206, 63
        %s209 = smul.addr %s208, 4
        %s210 = scalar_lea.vmem %s0, %s209
        %s211 = smul.u32 16, %s12
      $region40: #{model_a2c_forward.1} parent=35 // pred_fallthru
        _
    $region36: #{model_a2c_forward.1} parent=5 // pred_fallthru
      _
    %p212 = scmp.le.s32.totalorder 1, %s12
    %p213 = scmp.lt.s32.totalorder %s12, 5
    %p214 = pnand %p212, %p213
    %p215 = pneg %p214
    // Predicated region
    $region41: #{model_a2c_forward.1} parent=5 // pred_check
      _
    $region42: #{model_a2c_forward.1} parent=5 // pred_check_branch
      %217 = sbr.rel (%p214) target = $region44
    $region43: #{model_a2c_forward.1} parent=5 // pred_region
      %s218 = ssub.s32 %s12, 1
      %s219 = smul.u32 16, %s17
      %p220 = scmp.lt.s32.totalorder %s219, 63
      %s221 = scalar_select %p220, %s219, 63
      %s222 = smul.addr %s221, 4
      %s223 = scalar_lea.vmem %s0, %s222
      %p224 = pneg %p38
      %p225 = pneg %p35
      %p226 = pneg %p59
      %p227 = pneg %p56
      %p228 = pneg %p80
      %p229 = pneg %p77
      %p230 = pneg %p101
      %p231 = pneg %p98
      %p232 = pneg %p122
      %p233 = pneg %p119
      %p234 = pneg %p143
      %p235 = pneg %p140
      %p236 = pneg %p169
      %p237 = pneg %p166
      %s238 = smul.u32 16, %s17
      %p239 = scmp.lt.s32.totalorder %s238, 63
      %s240 = scalar_select %p239, %s238, 63
      %s241 = smul.addr %s240, 4
      %s242 = scalar_lea.vmem %s6, %s241
      %s243 = smul.u32 16, %s17
      %p244 = scmp.lt.s32.totalorder %s243, 63
      %s245 = scalar_select %p244, %s243, 63
      %s246 = smul.addr %s245, 4
      %s247 = scalar_lea.vmem %s0, %s246
      %s248 = smul.u32 16, %s17
      %s249 = smul.u32 16, %s17
      %p250 = scmp.lt.s32.totalorder %s249, 63
      %s251 = scalar_select %p250, %s249, 63
      %s252 = smul.addr %s251, 4
      %s253 = scalar_lea.vmem %s6, %s252
      %s254 = smul.u32 16, %s17
      %v256 = vld [vmem:[%s247] sm:$0xf]
      %v257 = vld [vmem:[%s247 + $0x4] sm:$0xf]
      %v258 = vld [vmem:[%s247 + $0x8] sm:$0xf]
      %v259 = vld [vmem:[%s247 + $0xc] sm:$0xf]
      %v260 = vld [vmem:[%s247 + $0x10] sm:$0xf]
      %v261 = vld [vmem:[%s247 + $0x14] sm:$0xf]
      %v262 = vld [vmem:[%s247 + $0x18] sm:$0xf]
      %v263 = vld [vmem:[%s247 + $0x1c] sm:$0xf]
      %v264 = vld [vmem:[%s247 + $0x20] sm:$0xf]
      %v265 = vld [vmem:[%s247 + $0x24] sm:$0xf]
      %v266 = vld [vmem:[%s247 + $0x28] sm:$0xf]
      %v267 = vld [vmem:[%s247 + $0x2c] sm:$0xf]
      %v268 = vld [vmem:[%s247 + $0x30] sm:$0xf]
      %v269 = vld [vmem:[%s247 + $0x34] sm:$0xf]
      %v270 = vld [vmem:[%s247 + $0x38] sm:$0xf]
      %v271 = vld [vmem:[%s247 + $0x3c] sm:$0xf]
      %v272 = vld [vmem:[%s1] sm:$0xf]
      %v273 = vld [vmem:[%s1 + $0x4] sm:$0xf]
      %v274 = vld [vmem:[%s2] sm:$0x1]
      %v276 = vlaneseq
      %v277 = vshrl.u32 %v276, 7
      %v278 = vsub.s32 0, %v277
      %v279 = vrot.slane %v274, %v278
      %v297 = vunpack.c.l.b16 %v256
      %v298 = vunpack.c.l.b16 %v257
      %v299 = vunpack.c.l.b16 %v258
      %v300 = vunpack.c.l.b16 %v259
      %v301 = vunpack.c.l.b16 %v260
      %v302 = vunpack.c.l.b16 %v261
      %v303 = vunpack.c.l.b16 %v262
      %v304 = vunpack.c.l.b16 %v263
      %v305 = vunpack.c.l.b16 %v264
      %v306 = vunpack.c.l.b16 %v265
      %v307 = vunpack.c.l.b16 %v266
      %v308 = vunpack.c.l.b16 %v267
      %v309 = vunpack.c.l.b16 %v268
      %v310 = vunpack.c.l.b16 %v269
      %v311 = vunpack.c.l.b16 %v270
      %v312 = vunpack.c.l.b16 %v271
      %v313 = vpack.c.b16 %v298, %v297
      %v314 = vpack.c.b16 %v300, %v299
      %v315 = vpack.c.b16 %v302, %v301
      %v316 = vpack.c.b16 %v304, %v303
      %v317 = vpack.c.b16 %v306, %v305
      %v318 = vpack.c.b16 %v308, %v307
      %v319 = vpack.c.b16 %v310, %v309
      %v320 = vpack.c.b16 %v312, %v311
      %v323 = vunpack.c.l.b16 %v272
      %v324 = vunpack.c.l.b16 %v273
      %v325 = vpack.c.b16 %v324, %v323
      %vm327 = vcmask 130048
      %v329 = vsel %vm327, %v313, 0
      %v332 = vsel %vm327, %v314, 0
      %v335 = vsel %vm327, %v315, 0
      %v338 = vsel %vm327, %v316, 0
      %v341 = vsel %vm327, %v317, 0
      %v344 = vsel %vm327, %v318, 0
      %v347 = vsel %vm327, %v319, 0
      %v350 = vsel %vm327, %v320, 0
      %352 = vmatprep.subr.bf16.mxu0 0
      %353 = vmatpush1.bf16.msra.mxu0 %v325
      %354 = vmatprep.subr.bf16.mxu0 0
      %355 = vmatpush1.bf16.msra.mxu0 0
      %356 = vmatprep.subr.bf16.mxu0 0
      %357 = vmatpush1.bf16.msra.mxu0 0
      %358 = vmatprep.subr.bf16.mxu0 0
      %359 = vmatpush1.bf16.msra.mxu0 0
      %360 = vmatprep.subr.bf16.mxu0 0
      %361 = vmatpush1.bf16.msra.mxu0 0
      %362 = vmatprep.subr.bf16.mxu0 0
      %363 = vmatpush1.bf16.msra.mxu0 0
      %364 = vmatprep.subr.bf16.mxu0 0
      %365 = vmatpush1.bf16.msra.mxu0 0
      %366 = vmatprep.subr.bf16.mxu0 0
      %367 = vmatpush1.bf16.msra.mxu0 0
      %368 = vmatprep.subr.bf16.mxu0 0
      %369 = vmatpush1.bf16.msra.mxu0 0
      %370 = vmatprep.subr.bf16.mxu0 0
      %371 = vmatpush1.bf16.msra.mxu0 0
      %372 = vmatprep.subr.bf16.mxu0 0
      %373 = vmatpush1.bf16.msra.mxu0 0
      %374 = vmatprep.subr.bf16.mxu0 0
      %375 = vmatpush1.bf16.msra.mxu0 0
      %376 = vmatprep.subr.bf16.mxu0 0
      %377 = vmatpush1.bf16.msra.mxu0 0
      %378 = vmatprep.subr.bf16.mxu0 0
      %379 = vmatpush1.bf16.msra.mxu0 0
      %380 = vmatprep.subr.bf16.mxu0 0
      %381 = vmatpush1.bf16.msra.mxu0 0
      %382 = vmatprep.subr.bf16.mxu0 0
      %383 = vmatpush1.bf16.msra.mxu0 0
      %384 = vmatprep.mubr.bf16.mxu0 0
      %385 = vmatmul.mubr.bf16.gmra.mrb[0].mxu0 %v329
      %v386 = vpop.f32.mrb[0].mxu0
      %v387 = vadd.f32 %v279, %v386
      %v388 = vpop.f32.mrb[0].mxu0
      %v389 = vpop.f32.mrb[0].mxu0
      %v390 = vadd.f32 %v279, %v389
      %v391 = vpop.f32.mrb[0].mxu0
      %392 = vmatprep.mubr.bf16.mxu0 0
      %393 = vmatmul.mubr.bf16.gmra.mrb[0].mxu0 %v332
      %v394 = vpop.f32.mrb[0].mxu0
      %v395 = vadd.f32 %v279, %v394
      %v396 = vpop.f32.mrb[0].mxu0
      %v397 = vpop.f32.mrb[0].mxu0
      %v398 = vadd.f32 %v279, %v397
      %v399 = vpop.f32.mrb[0].mxu0
      %400 = vmatprep.mubr.bf16.mxu0 0
      %401 = vmatmul.mubr.bf16.gmra.mrb[0].mxu0 %v335
      %v402 = vpop.f32.mrb[0].mxu0
      %v403 = vadd.f32 %v279, %v402
      %v404 = vpop.f32.mrb[0].mxu0
      %v405 = vpop.f32.mrb[0].mxu0
      %v406 = vadd.f32 %v279, %v405
      %v407 = vpop.f32.mrb[0].mxu0
      %408 = vmatprep.mubr.bf16.mxu0 0
      %409 = vmatmul.mubr.bf16.gmra.mrb[0].mxu0 %v338
      %v410 = vpop.f32.mrb[0].mxu0
      %v411 = vadd.f32 %v279, %v410
      %v412 = vpop.f32.mrb[0].mxu0
      %v413 = vpop.f32.mrb[0].mxu0
      %v414 = vadd.f32 %v279, %v413
      %v415 = vpop.f32.mrb[0].mxu0
      %416 = vmatprep.mubr.bf16.mxu0 0
      %417 = vmatmul.mubr.bf16.gmra.mrb[0].mxu0 %v341
      %v418 = vpop.f32.mrb[0].mxu0
      %v419 = vadd.f32 %v279, %v418
      %v420 = vpop.f32.mrb[0].mxu0
      %v421 = vpop.f32.mrb[0].mxu0
      %v422 = vadd.f32 %v279, %v421
      %v423 = vpop.f32.mrb[0].mxu0
      %424 = vmatprep.mubr.bf16.mxu0 0
      %425 = vmatmul.mubr.bf16.gmra.mrb[0].mxu0 %v344
      %v426 = vpop.f32.mrb[0].mxu0
      %v427 = vadd.f32 %v279, %v426
      %v428 = vpop.f32.mrb[0].mxu0
      %v429 = vpop.f32.mrb[0].mxu0
      %v430 = vadd.f32 %v279, %v429
      %v431 = vpop.f32.mrb[0].mxu0
      %432 = vmatprep.mubr.bf16.mxu0 0
      %433 = vmatmul.mubr.bf16.gmra.mrb[0].mxu0 %v347
      %v434 = vpop.f32.mrb[0].mxu0
      %v435 = vadd.f32 %v279, %v434
      %v436 = vpop.f32.mrb[0].mxu0
      %v437 = vpop.f32.mrb[0].mxu0
      %v438 = vadd.f32 %v279, %v437
      %v439 = vpop.f32.mrb[0].mxu0
      %440 = vmatprep.mubr.bf16.mxu0 0
      %441 = vmatmul.mubr.bf16.gmra.mrb[0].mxu0 %v350
      %v442 = vpop.f32.mrb[0].mxu0
      %v443 = vadd.f32 %v279, %v442
      %v444 = vpop.f32.mrb[0].mxu0
      %v445 = vpop.f32.mrb[0].mxu0
      %v446 = vadd.f32 %v279, %v445
      %v447 = vpop.f32.mrb[0].mxu0
      %448 = vdwg.mxu0
      %v449 = vmax.f32 %v387, 0.0
      %v450 = vmax.f32 %v390, 0.0
      %v451 = vmax.f32 %v395, 0.0
      %v452 = vmax.f32 %v398, 0.0
      %v453 = vmax.f32 %v403, 0.0
      %v454 = vmax.f32 %v406, 0.0
      %v455 = vmax.f32 %v411, 0.0
      %v456 = vmax.f32 %v414, 0.0
      %v457 = vmax.f32 %v419, 0.0
      %v458 = vmax.f32 %v422, 0.0
      %v459 = vmax.f32 %v427, 0.0
      %v460 = vmax.f32 %v430, 0.0
      %v461 = vmax.f32 %v435, 0.0
      %v462 = vmax.f32 %v438, 0.0
      %v463 = vmax.f32 %v443, 0.0
      %v464 = vmax.f32 %v446, 0.0
      %v465 = vpack.c.bf16 %v450, %v449
      %v466 = vpack.c.bf16 %v452, %v451
      %v467 = vpack.c.bf16 %v454, %v453
      %v468 = vpack.c.bf16 %v456, %v455
      %v469 = vpack.c.bf16 %v458, %v457
      %v470 = vpack.c.bf16 %v460, %v459
      %v471 = vpack.c.bf16 %v462, %v461
      %v472 = vpack.c.bf16 %v464, %v463
      %v473 = vld [vmem:[%s3] sm:$0xf]
      %v474 = vld [vmem:[%s3 + $0x4] sm:$0xf]
      %v475 = vld [vmem:[%s3 + $0x8] sm:$0xf]
      %v476 = vld [vmem:[%s3 + $0xc] sm:$0xf]
      %v477 = vld [vmem:[%s4] sm:$0x1]
      %v479 = vlaneseq
      %v480 = vshrl.u32 %v479, 7
      %v481 = vsub.s32 0, %v480
      %v482 = vrot.slane %v477, %v481
      %v488 = vunpack.c.l.b16 %v473
      %v489 = vunpack.c.l.b16 %v474
      %v490 = vunpack.c.l.b16 %v475
      %v491 = vunpack.c.l.b16 %v476
      %v492 = vpack.c.b16 %v489, %v488
      %v493 = vpack.c.b16 %v491, %v490
      %vm496 = vcmask 261120
      %v498 = vsel %vm496, %v465, 0
      %v501 = vsel %vm496, %v466, 0
      %v504 = vsel %vm496, %v467, 0
      %v507 = vsel %vm496, %v468, 0
      %v510 = vsel %vm496, %v469, 0
      %v513 = vsel %vm496, %v470, 0
      %v516 = vsel %vm496, %v471, 0
      %v519 = vsel %vm496, %v472, 0
      %521 = vmatprep.subr.bf16.mxu0 0
      %522 = vmatpush1.bf16.msra.mxu0 %v492
      %523 = vmatprep.subr.bf16.mxu0 0
      %524 = vmatpush1.bf16.msra.mxu0 %v493
      %525 = vmatprep.subr.bf16.mxu0 0
      %526 = vmatpush1.bf16.msra.mxu0 0
      %527 = vmatprep.subr.bf16.mxu0 0
      %528 = vmatpush1.bf16.msra.mxu0 0
      %529 = vmatprep.subr.bf16.mxu0 0
      %530 = vmatpush1.bf16.msra.mxu0 0
      %531 = vmatprep.subr.bf16.mxu0 0
      %532 = vmatpush1.bf16.msra.mxu0 0
      %533 = vmatprep.subr.bf16.mxu0 0
      %534 = vmatpush1.bf16.msra.mxu0 0
      %535 = vmatprep.subr.bf16.mxu0 0
      %536 = vmatpush1.bf16.msra.mxu0 0
      %537 = vmatprep.subr.bf16.mxu0 0
      %538 = vmatpush1.bf16.msra.mxu0 0
      %539 = vmatprep.subr.bf16.mxu0 0
      %540 = vmatpush1.bf16.msra.mxu0 0
      %541 = vmatprep.subr.bf16.mxu0 0
      %542 = vmatpush1.bf16.msra.mxu0 0
      %543 = vmatprep.subr.bf16.mxu0 0
      %544 = vmatpush1.bf16.msra.mxu0 0
      %545 = vmatprep.subr.bf16.mxu0 0
      %546 = vmatpush1.bf16.msra.mxu0 0
      %547 = vmatprep.subr.bf16.mxu0 0
      %548 = vmatpush1.bf16.msra.mxu0 0
      %549 = vmatprep.subr.bf16.mxu0 0
      %550 = vmatpush1.bf16.msra.mxu0 0
      %551 = vmatprep.subr.bf16.mxu0 0
      %552 = vmatpush1.bf16.msra.mxu0 0
      %553 = vmatprep.mubr.bf16.mxu0 0
      %554 = vmatmul.mubr.bf16.gmra.mrb[0].mxu0 %v498
      %v555 = vpop.f32.mrb[0].mxu0
      %v556 = vadd.f32 %v482, %v555
      %v557 = vpop.f32.mrb[0].mxu0
      %v558 = vpop.f32.mrb[0].mxu0
      %v559 = vadd.f32 %v482, %v558
      %v560 = vpop.f32.mrb[0].mxu0
      %561 = vmatprep.mubr.bf16.mxu0 0
      %562 = vmatmul.mubr.bf16.gmra.mrb[0].mxu0 %v501
      %v563 = vpop.f32.mrb[0].mxu0
      %v564 = vadd.f32 %v482, %v563
      %v565 = vpop.f32.mrb[0].mxu0
      %v566 = vpop.f32.mrb[0].mxu0
      %v567 = vadd.f32 %v482, %v566
      %v568 = vpop.f32.mrb[0].mxu0
      %569 = vmatprep.mubr.bf16.mxu0 0
      %570 = vmatmul.mubr.bf16.gmra.mrb[0].mxu0 %v504
      %v571 = vpop.f32.mrb[0].mxu0
      %v572 = vadd.f32 %v482, %v571
      %v573 = vpop.f32.mrb[0].mxu0
      %v574 = vpop.f32.mrb[0].mxu0
      %v575 = vadd.f32 %v482, %v574
      %v576 = vpop.f32.mrb[0].mxu0
      %577 = vmatprep.mubr.bf16.mxu0 0
      %578 = vmatmul.mubr.bf16.gmra.mrb[0].mxu0 %v507
      %v579 = vpop.f32.mrb[0].mxu0
      %v580 = vadd.f32 %v482, %v579
      %v581 = vpop.f32.mrb[0].mxu0
      %v582 = vpop.f32.mrb[0].mxu0
      %v583 = vadd.f32 %v482, %v582
      %v584 = vpop.f32.mrb[0].mxu0
      %585 = vmatprep.mubr.bf16.mxu0 0
      %586 = vmatmul.mubr.bf16.gmra.mrb[0].mxu0 %v510
      %v587 = vpop.f32.mrb[0].mxu0
      %v588 = vadd.f32 %v482, %v587
      %v589 = vpop.f32.mrb[0].mxu0
      %v590 = vpop.f32.mrb[0].mxu0
      %v591 = vadd.f32 %v482, %v590
      %v592 = vpop.f32.mrb[0].mxu0
      %593 = vmatprep.mubr.bf16.mxu0 0
      %594 = vmatmul.mubr.bf16.gmra.mrb[0].mxu0 %v513
      %v595 = vpop.f32.mrb[0].mxu0
      %v596 = vadd.f32 %v482, %v595
      %v597 = vpop.f32.mrb[0].mxu0
      %v598 = vpop.f32.mrb[0].mxu0
      %v599 = vadd.f32 %v482, %v598
      %v600 = vpop.f32.mrb[0].mxu0
      %601 = vmatprep.mubr.bf16.mxu0 0
      %602 = vmatmul.mubr.bf16.gmra.mrb[0].mxu0 %v516
      %v603 = vpop.f32.mrb[0].mxu0
      %v604 = vadd.f32 %v482, %v603
      %v605 = vpop.f32.mrb[0].mxu0
      %v606 = vpop.f32.mrb[0].mxu0
      %v607 = vadd.f32 %v482, %v606
      %v608 = vpop.f32.mrb[0].mxu0
      %609 = vmatprep.mubr.bf16.mxu0 0
      %610 = vmatmul.mubr.bf16.gmra.mrb[0].mxu0 %v519
      %v611 = vpop.f32.mrb[0].mxu0
      %v612 = vadd.f32 %v482, %v611
      %v613 = vpop.f32.mrb[0].mxu0
      %v614 = vpop.f32.mrb[0].mxu0
      %v615 = vadd.f32 %v482, %v614
      %v616 = vpop.f32.mrb[0].mxu0
      %617 = vdwg.mxu0
      %v618 = vmax.f32 %v556, 0.0
      %v619 = vmax.f32 %v559, 0.0
      %v620 = vmax.f32 %v564, 0.0
      %v621 = vmax.f32 %v567, 0.0
      %v622 = vmax.f32 %v572, 0.0
      %v623 = vmax.f32 %v575, 0.0
      %v624 = vmax.f32 %v580, 0.0
      %v625 = vmax.f32 %v583, 0.0
      %v626 = vmax.f32 %v588, 0.0
      %v627 = vmax.f32 %v591, 0.0
      %v628 = vmax.f32 %v596, 0.0
      %v629 = vmax.f32 %v599, 0.0
      %v630 = vmax.f32 %v604, 0.0
      %v631 = vmax.f32 %v607, 0.0
      %v632 = vmax.f32 %v612, 0.0
      %v633 = vmax.f32 %v615, 0.0
      %v634 = vand.u32 2147483647, %v556
      %v635 = vand.u32 2147483647, %v559
      %v636 = vand.u32 2147483647, %v564
      %v637 = vand.u32 2147483647, %v567
      %v638 = vand.u32 2147483647, %v572
      %v639 = vand.u32 2147483647, %v575
      %v640 = vand.u32 2147483647, %v580
      %v641 = vand.u32 2147483647, %v583
      %v642 = vand.u32 2147483647, %v588
      %v643 = vand.u32 2147483647, %v591
      %v644 = vand.u32 2147483647, %v596
      %v645 = vand.u32 2147483647, %v599
      %v646 = vand.u32 2147483647, %v604
      %v647 = vand.u32 2147483647, %v607
      %v648 = vand.u32 2147483647, %v612
      %v649 = vand.u32 2147483647, %v615
      %v650 = vsub.f32 0.0, %v634
      %v651 = vsub.f32 0.0, %v635
      %v652 = vsub.f32 0.0, %v636
      %v653 = vsub.f32 0.0, %v637
      %v654 = vsub.f32 0.0, %v638
      %v655 = vsub.f32 0.0, %v639
      %v656 = vsub.f32 0.0, %v640
      %v657 = vsub.f32 0.0, %v641
      %v658 = vsub.f32 0.0, %v642
      %v659 = vsub.f32 0.0, %v643
      %v660 = vsub.f32 0.0, %v644
      %v661 = vsub.f32 0.0, %v645
      %v662 = vsub.f32 0.0, %v646
      %v663 = vsub.f32 0.0, %v647
      %v664 = vsub.f32 0.0, %v648
      %v665 = vsub.f32 0.0, %v649
      %v666 = vmul.f32 %v650, 1.442695
      %v667 = vpow.pop %v666
      %v668 = vmul.f32 %v651, 1.442695
      %v669 = vpow.pop %v668
      %v670 = vmul.f32 %v652, 1.442695
      %v671 = vpow.pop %v670
      %v672 = vmul.f32 %v653, 1.442695
      %v673 = vpow.pop %v672
      %v674 = vmul.f32 %v654, 1.442695
      %v675 = vpow.pop %v674
      %v676 = vmul.f32 %v655, 1.442695
      %v677 = vpow.pop %v676
      %v678 = vmul.f32 %v656, 1.442695
      %v679 = vpow.pop %v678
      %v680 = vmul.f32 %v657, 1.442695
      %v681 = vpow.pop %v680
      %v682 = vmul.f32 %v658, 1.442695
      %v683 = vpow.pop %v682
      %v684 = vmul.f32 %v659, 1.442695
      %v685 = vpow.pop %v684
      %v686 = vmul.f32 %v660, 1.442695
      %v687 = vpow.pop %v686
      %v688 = vmul.f32 %v661, 1.442695
      %v689 = vpow.pop %v688
      %v690 = vmul.f32 %v662, 1.442695
      %v691 = vpow.pop %v690
      %v692 = vmul.f32 %v663, 1.442695
      %v693 = vpow.pop %v692
      %v694 = vmul.f32 %v664, 1.442695
      %v695 = vpow.pop %v694
      %v696 = vmul.f32 %v665, 1.442695
      %v697 = vpow.pop %v696
      %v698 = vadd.f32 %v667, 1.0
      %v699 = vlog2.pop %v698
      %v700 = vmul.f32 %v699, 0.6931472
      %v701 = vmul.f32 -0.5, %v667
      %v702 = vadd.f32 %v701, 1.0
      %v703 = vmul.f32 %v702, %v667
      %v704 = vand.u32 2147483647, %v667
      %vm705 = vcmp.lt.f32.partialorder %v704, 0.0004427343
      %v706 = vsel %vm705, %v703, %v700
      %v707 = vadd.f32 %v669, 1.0
      %v708 = vlog2.pop %v707
      %v709 = vmul.f32 %v708, 0.6931472
      %v710 = vmul.f32 -0.5, %v669
      %v711 = vadd.f32 %v710, 1.0
      %v712 = vmul.f32 %v711, %v669
      %v713 = vand.u32 2147483647, %v669
      %vm714 = vcmp.lt.f32.partialorder %v713, 0.0004427343
      %v715 = vsel %vm714, %v712, %v709
      %v716 = vadd.f32 %v671, 1.0
      %v717 = vlog2.pop %v716
      %v718 = vmul.f32 %v717, 0.6931472
      %v719 = vmul.f32 -0.5, %v671
      %v720 = vadd.f32 %v719, 1.0
      %v721 = vmul.f32 %v720, %v671
      %v722 = vand.u32 2147483647, %v671
      %vm723 = vcmp.lt.f32.partialorder %v722, 0.0004427343
      %v724 = vsel %vm723, %v721, %v718
      %v725 = vadd.f32 %v673, 1.0
      %v726 = vlog2.pop %v725
      %v727 = vmul.f32 %v726, 0.6931472
      %v728 = vmul.f32 -0.5, %v673
      %v729 = vadd.f32 %v728, 1.0
      %v730 = vmul.f32 %v729, %v673
      %v731 = vand.u32 2147483647, %v673
      %vm732 = vcmp.lt.f32.partialorder %v731, 0.0004427343
      %v733 = vsel %vm732, %v730, %v727
      %v734 = vadd.f32 %v675, 1.0
      %v735 = vlog2.pop %v734
      %v736 = vmul.f32 %v735, 0.6931472
      %v737 = vmul.f32 -0.5, %v675
      %v738 = vadd.f32 %v737, 1.0
      %v739 = vmul.f32 %v738, %v675
      %v740 = vand.u32 2147483647, %v675
      %vm741 = vcmp.lt.f32.partialorder %v740, 0.0004427343
      %v742 = vsel %vm741, %v739, %v736
      %v743 = vadd.f32 %v677, 1.0
      %v744 = vlog2.pop %v743
      %v745 = vmul.f32 %v744, 0.6931472
      %v746 = vmul.f32 -0.5, %v677
      %v747 = vadd.f32 %v746, 1.0
      %v748 = vmul.f32 %v747, %v677
      %v749 = vand.u32 2147483647, %v677
      %vm750 = vcmp.lt.f32.partialorder %v749, 0.0004427343
      %v751 = vsel %vm750, %v748, %v745
      %v752 = vadd.f32 %v679, 1.0
      %v753 = vlog2.pop %v752
      %v754 = vmul.f32 %v753, 0.6931472
      %v755 = vmul.f32 -0.5, %v679
      %v756 = vadd.f32 %v755, 1.0
      %v757 = vmul.f32 %v756, %v679
      %v758 = vand.u32 2147483647, %v679
      %vm759 = vcmp.lt.f32.partialorder %v758, 0.0004427343
      %v760 = vsel %vm759, %v757, %v754
      %v761 = vadd.f32 %v681, 1.0
      %v762 = vlog2.pop %v761
      %v763 = vmul.f32 %v762, 0.6931472
      %v764 = vmul.f32 -0.5, %v681
      %v765 = vadd.f32 %v764, 1.0
      %v766 = vmul.f32 %v765, %v681
      %v767 = vand.u32 2147483647, %v681
      %vm768 = vcmp.lt.f32.partialorder %v767, 0.0004427343
      %v769 = vsel %vm768, %v766, %v763
      %v770 = vadd.f32 %v683, 1.0
      %v771 = vlog2.pop %v770
      %v772 = vmul.f32 %v771, 0.6931472
      %v773 = vmul.f32 -0.5, %v683
      %v774 = vadd.f32 %v773, 1.0
      %v775 = vmul.f32 %v774, %v683
      %v776 = vand.u32 2147483647, %v683
      %vm777 = vcmp.lt.f32.partialorder %v776, 0.0004427343
      %v778 = vsel %vm777, %v775, %v772
      %v779 = vadd.f32 %v685, 1.0
      %v780 = vlog2.pop %v779
      %v781 = vmul.f32 %v780, 0.6931472
      %v782 = vmul.f32 -0.5, %v685
      %v783 = vadd.f32 %v782, 1.0
      %v784 = vmul.f32 %v783, %v685
      %v785 = vand.u32 2147483647, %v685
      %vm786 = vcmp.lt.f32.partialorder %v785, 0.0004427343
      %v787 = vsel %vm786, %v784, %v781
      %v788 = vadd.f32 %v687, 1.0
      %v789 = vlog2.pop %v788
      %v790 = vmul.f32 %v789, 0.6931472
      %v791 = vmul.f32 -0.5, %v687
      %v792 = vadd.f32 %v791, 1.0
      %v793 = vmul.f32 %v792, %v687
      %v794 = vand.u32 2147483647, %v687
      %vm795 = vcmp.lt.f32.partialorder %v794, 0.0004427343
      %v796 = vsel %vm795, %v793, %v790
      %v797 = vadd.f32 %v689, 1.0
      %v798 = vlog2.pop %v797
      %v799 = vmul.f32 %v798, 0.6931472
      %v800 = vmul.f32 -0.5, %v689
      %v801 = vadd.f32 %v800, 1.0
      %v802 = vmul.f32 %v801, %v689
      %v803 = vand.u32 2147483647, %v689
      %vm804 = vcmp.lt.f32.partialorder %v803, 0.0004427343
      %v805 = vsel %vm804, %v802, %v799
      %v806 = vadd.f32 %v691, 1.0
      %v807 = vlog2.pop %v806
      %v808 = vmul.f32 %v807, 0.6931472
      %v809 = vmul.f32 -0.5, %v691
      %v810 = vadd.f32 %v809, 1.0
      %v811 = vmul.f32 %v810, %v691
      %v812 = vand.u32 2147483647, %v691
      %vm813 = vcmp.lt.f32.partialorder %v812, 0.0004427343
      %v814 = vsel %vm813, %v811, %v808
      %v815 = vadd.f32 %v693, 1.0
      %v816 = vlog2.pop %v815
      %v817 = vmul.f32 %v816, 0.6931472
      %v818 = vmul.f32 -0.5, %v693
      %v819 = vadd.f32 %v818, 1.0
      %v820 = vmul.f32 %v819, %v693
      %v821 = vand.u32 2147483647, %v693
      %vm822 = vcmp.lt.f32.partialorder %v821, 0.0004427343
      %v823 = vsel %vm822, %v820, %v817
      %v824 = vadd.f32 %v695, 1.0
      %v825 = vlog2.pop %v824
      %v826 = vmul.f32 %v825, 0.6931472
      %v827 = vmul.f32 -0.5, %v695
      %v828 = vadd.f32 %v827, 1.0
      %v829 = vmul.f32 %v828, %v695
      %v830 = vand.u32 2147483647, %v695
      %vm831 = vcmp.lt.f32.partialorder %v830, 0.0004427343
      %v832 = vsel %vm831, %v829, %v826
      %v833 = vadd.f32 %v697, 1.0
      %v834 = vlog2.pop %v833
      %v835 = vmul.f32 %v834, 0.6931472
      %v836 = vmul.f32 -0.5, %v697
      %v837 = vadd.f32 %v836, 1.0
      %v838 = vmul.f32 %v837, %v697
      %v839 = vand.u32 2147483647, %v697
      %vm840 = vcmp.lt.f32.partialorder %v839, 0.0004427343
      %v841 = vsel %vm840, %v838, %v835
      %v842 = vadd.f32 %v618, %v706
      %v843 = vadd.f32 %v619, %v715
      %v844 = vadd.f32 %v620, %v724
      %v845 = vadd.f32 %v621, %v733
      %v846 = vadd.f32 %v622, %v742
      %v847 = vadd.f32 %v623, %v751
      %v848 = vadd.f32 %v624, %v760
      %v849 = vadd.f32 %v625, %v769
      %v850 = vadd.f32 %v626, %v778
      %v851 = vadd.f32 %v627, %v787
      %v852 = vadd.f32 %v628, %v796
      %v853 = vadd.f32 %v629, %v805
      %v854 = vadd.f32 %v630, %v814
      %v855 = vadd.f32 %v631, %v823
      %v856 = vadd.f32 %v632, %v832
      %v857 = vadd.f32 %v633, %v841
      %v858 = vld [vmem:[%s5] sm:$0x1]
      %v859 = vsub.f32 %v842, %v556
      %v860 = vsub.f32 %v843, %v559
      %v861 = vsub.f32 %v844, %v564
      %v862 = vsub.f32 %v845, %v567
      %v863 = vsub.f32 %v846, %v572
      %v864 = vsub.f32 %v847, %v575
      %v865 = vsub.f32 %v848, %v580
      %v866 = vsub.f32 %v849, %v583
      %v867 = vsub.f32 %v850, %v588
      %v868 = vsub.f32 %v851, %v591
      %v869 = vsub.f32 %v852, %v596
      %v870 = vsub.f32 %v853, %v599
      %v871 = vsub.f32 %v854, %v604
      %v872 = vsub.f32 %v855, %v607
      %v873 = vsub.f32 %v856, %v612
      %v874 = vsub.f32 %v857, %v615
      %v876 = vlaneseq
      %v877 = vshrl.u32 %v876, 7
      %v878 = vsub.s32 0, %v877
      %v879 = vrot.slane %v858, %v878
      %v881 = vmul.f32 %v879, %v859
      %v882 = vmul.f32 %v879, %v860
      %v883 = vmul.f32 %v879, %v861
      %v884 = vmul.f32 %v879, %v862
      %v885 = vmul.f32 %v879, %v863
      %v886 = vmul.f32 %v879, %v864
      %v887 = vmul.f32 %v879, %v865
      %v888 = vmul.f32 %v879, %v866
      %v889 = vmul.f32 %v879, %v867
      %v890 = vmul.f32 %v879, %v868
      %v891 = vmul.f32 %v879, %v869
      %v892 = vmul.f32 %v879, %v870
      %v893 = vmul.f32 %v879, %v871
      %v894 = vmul.f32 %v879, %v872
      %v895 = vmul.f32 %v879, %v873
      %v896 = vmul.f32 %v879, %v874
      %v897 = vadd.f32 %v556, %v881
      %v898 = vadd.f32 %v559, %v882
      %v899 = vadd.f32 %v564, %v883
      %v900 = vadd.f32 %v567, %v884
      %v901 = vadd.f32 %v572, %v885
      %v902 = vadd.f32 %v575, %v886
      %v903 = vadd.f32 %v580, %v887
      %v904 = vadd.f32 %v583, %v888
      %v905 = vadd.f32 %v588, %v889
      %v906 = vadd.f32 %v591, %v890
      %v907 = vadd.f32 %v596, %v891
      %v908 = vadd.f32 %v599, %v892
      %v909 = vadd.f32 %v604, %v893
      %v910 = vadd.f32 %v607, %v894
      %v911 = vadd.f32 %v612, %v895
      %v912 = vadd.f32 %v615, %v896
      %v913 = vpack.c.bf16 %v898, %v897
      %v914 = vpack.c.bf16 %v900, %v899
      %v915 = vpack.c.bf16 %v902, %v901
      %v916 = vpack.c.bf16 %v904, %v903
      %v917 = vpack.c.bf16 %v906, %v905
      %v918 = vpack.c.bf16 %v908, %v907
      %v919 = vpack.c.bf16 %v910, %v909
      %v920 = vpack.c.bf16 %v912, %v911
      %v929 = vunpack.c.l.b16 %v913
      %v930 = vunpack.c.h.b16 %v913
      %v931 = vunpack.c.l.b16 %v914
      %v932 = vunpack.c.h.b16 %v914
      %v933 = vunpack.c.l.b16 %v915
      %v934 = vunpack.c.h.b16 %v915
      %v935 = vunpack.c.l.b16 %v916
      %v936 = vunpack.c.h.b16 %v916
      %v937 = vunpack.c.l.b16 %v917
      %v938 = vunpack.c.h.b16 %v917
      %v939 = vunpack.c.l.b16 %v918
      %v940 = vunpack.c.h.b16 %v918
      %v941 = vunpack.c.l.b16 %v919
      %v942 = vunpack.c.h.b16 %v919
      %v943 = vunpack.c.l.b16 %v920
      %v944 = vunpack.c.h.b16 %v920
      %v945 = vpack.c.b16 %v929, %v929
      %v946 = vpack.c.b16 %v930, %v930
      %v947 = vpack.c.b16 %v931, %v931
      %v948 = vpack.c.b16 %v932, %v932
      %v949 = vpack.c.b16 %v933, %v933
      %v950 = vpack.c.b16 %v934, %v934
      %v951 = vpack.c.b16 %v935, %v935
      %v952 = vpack.c.b16 %v936, %v936
      %v953 = vpack.c.b16 %v937, %v937
      %v954 = vpack.c.b16 %v938, %v938
      %v955 = vpack.c.b16 %v939, %v939
      %v956 = vpack.c.b16 %v940, %v940
      %v957 = vpack.c.b16 %v941, %v941
      %v958 = vpack.c.b16 %v942, %v942
      %v959 = vpack.c.b16 %v943, %v943
      %v960 = vpack.c.b16 %v944, %v944
      %977 = vst [vmem:[%s253] sm:$0xf] %v945
      %978 = vst [vmem:[%s253 + $0x4] sm:$0xf] %v946
      %979 = vst [vmem:[%s253 + $0x8] sm:$0xf] %v947
      %980 = vst [vmem:[%s253 + $0xc] sm:$0xf] %v948
      %981 = vst [vmem:[%s253 + $0x10] sm:$0xf] %v949
      %982 = vst [vmem:[%s253 + $0x14] sm:$0xf] %v950
      %983 = vst [vmem:[%s253 + $0x18] sm:$0xf] %v951
      %984 = vst [vmem:[%s253 + $0x1c] sm:$0xf] %v952
      %985 = vst [vmem:[%s253 + $0x20] sm:$0xf] %v953
      %986 = vst [vmem:[%s253 + $0x24] sm:$0xf] %v954
      %987 = vst [vmem:[%s253 + $0x28] sm:$0xf] %v955
      %988 = vst [vmem:[%s253 + $0x2c] sm:$0xf] %v956
      %989 = vst [vmem:[%s253 + $0x30] sm:$0xf] %v957
      %990 = vst [vmem:[%s253 + $0x34] sm:$0xf] %v958
      %991 = vst [vmem:[%s253 + $0x38] sm:$0xf] %v959
      %992 = vst [vmem:[%s253 + $0x3c] sm:$0xf] %v960
      %s993 = smul.u32 16, %s17
      %p994 = scmp.lt.s32.totalorder %s993, 63
      %s995 = scalar_select %p994, %s993, 63
      %s996 = smul.addr %s995, 4
      %s997 = scalar_lea.vmem %s6, %s996
      // Predicated region
      $region45: #{model_a2c_forward.1} parent=43 // pred_check
        %p998 = pneg %p166
      $region46: #{model_a2c_forward.1} parent=43 // pred_check_branch
        %1000 = sbr.rel (%p998) target = $region48
      $region47: #{model_a2c_forward.1} parent=43 // pred_region
        %s1001 = smul.u32 16, %s17
      $region48: #{model_a2c_forward.1} parent=43 // pred_fallthru
        _
    $region44: #{model_a2c_forward.1} parent=5 // pred_fallthru
      _
    %p1002 = scmp.le.s32.totalorder 2, %s12
    // Predicated region
    $region49: #{model_a2c_forward.1} parent=5 // pred_check
      %p1003 = pneg %p1002
    $region50: #{model_a2c_forward.1} parent=5 // pred_check_branch
      %1005 = sbr.rel (%p1003) target = $region52
    $region51: #{model_a2c_forward.1} parent=5 // pred_region
      %s1006 = ssub.s32 %s12, 2
      // Predicated region
      $region53: #{model_a2c_forward.1} parent=51 // pred_check
        %p1007 = pneg %p172
      $region54: #{model_a2c_forward.1} parent=51 // pred_check_branch
        %1009 = sbr.rel (%p1007) target = $region56
      $region55: #{model_a2c_forward.1} parent=51 // pred_region
        %s1010 = smul.u32 16, %s18
        %p1011 = scmp.lt.s32.totalorder %s1010, 63
        %s1012 = scalar_select %p1011, %s1010, 63
        %s1013 = smul.addr %s1012, 4
        %s1014 = scalar_lea.vmem %s6, %s1013
      $region56: #{model_a2c_forward.1} parent=51 // pred_fallthru
        _
    $region52: #{model_a2c_forward.1} parent=5 // pred_fallthru
      _
  $region6: #{model_a2c_forward.1} parent=0 // loop_footer
    %s16 = sadd.s32 1, %s12
  $region7: #{model_a2c_forward.1} parent=0 // loop_footer_branch
    %11 = sbr.rel target = $region3
  $region8: #{model_a2c_forward.1} parent=0 // loop_exit
    _

</llo_original>
